<compile_context>
chip_gen: v5e
topology: v5e:2x2
jax: 0.10.0
libtpu: 0.0.40
codegen_flags: <defaults>
</compile_context>

<pallas_src>
import functools

import jax
import jax.numpy as jnp
from jax.experimental import pallas as pl
from jax.experimental.pallas import tpu as pltpu

HIDDEN = 88      # logical hidden width from the PyTorch module
LANE = 128       # TPU lane width: pad feature / hidden / output dims to this
SUBLANE = 8      # f32 sublane count: minimum batch-tile granularity


def _round_up(x, m):
    return (x + m - 1) // m * m


def dqn_mlp_kernel(x_ref, w1_ref, b1_ref, w2_ref, b2_ref, o_ref):
    # Fused, fully VMEM-resident, lane-dense tiles:
    #   h = tanh(x @ W1 + b1)   (MXU matmul + VPU add + EUP tanh)
    #   o = h @ W2 + b2         (MXU matmul + VPU add)
    h = jnp.dot(x_ref[...], w1_ref[...], preferred_element_type=jnp.float32)
    h = jnp.tanh(h + b1_ref[...])
    o_ref[...] = (
        jnp.dot(h, w2_ref[...], preferred_element_type=jnp.float32) + b2_ref[...]
    )


def pad_dqn_params(w1, b1, w2, b2):
    """Zero-pad the Linear parameters to lane-dense (…,128) shapes.

    Done once, off the hot path. Zero padding is exact: padded K columns/rows
    contribute 0 to the matmuls, padded output lanes are sliced away.
    """
    n_in, hidden = w1.shape
    _, n_out = w2.shape
    in_p = _round_up(n_in, LANE)
    h_p = _round_up(hidden, LANE)
    out_p = _round_up(n_out, LANE)
    w1_p = jnp.zeros((in_p, h_p), jnp.float32).at[:n_in, :hidden].set(w1)
    b1_p = jnp.zeros((1, h_p), jnp.float32).at[:, :hidden].set(b1.reshape(1, -1))
    w2_p = jnp.zeros((h_p, out_p), jnp.float32).at[:hidden, :n_out].set(w2)
    b2_p = jnp.zeros((1, out_p), jnp.float32).at[:, :n_out].set(b2.reshape(1, -1))
    return w1_p, b1_p, w2_p, b2_p


@functools.partial(jax.jit, static_argnames=("n_out", "tm"))
def dqn_forward(x, padded_params, *, n_out, tm=256):
    """x: (B, n_in) f32; padded_params from pad_dqn_params; returns (B, n_out) f32."""
    w1_p, b1_p, w2_p, b2_p = padded_params
    B, n_in = x.shape
    in_p, h_p = w1_p.shape
    out_p = w2_p.shape[1]

    # Row tile: fill the MXU (tm=256 on v6e/v7x, pass tm=128 on v5e) when the
    # batch is large; shrink to an 8-row tile for tiny act()-style calls.
    tm_eff = min(tm, _round_up(B, SUBLANE))
    b_pad = _round_up(B, tm_eff)

    # Pad activations to lane/sublane-dense (b_pad, 128); padded zeros are inert.
    x_p = jnp.zeros((b_pad, in_p), jnp.float32).at[:B, :n_in].set(x)

    q_pad = pl.pallas_call(
        dqn_mlp_kernel,
        out_shape=jax.ShapeDtypeStruct((b_pad, out_p), jnp.float32),
        grid_spec=pltpu.PrefetchScalarGridSpec(
            num_scalar_prefetch=0,
            grid=(b_pad // tm_eff,),
            in_specs=[
                # Activation tile: pipelined / double-buffered over the grid.
                pl.BlockSpec((tm_eff, in_p), lambda i: (i, 0)),
                # Weights & biases: index_map ignores the grid index, so they
                # stay VMEM-resident across all row tiles.
                pl.BlockSpec((in_p, h_p), lambda i: (0, 0)),
                pl.BlockSpec((1, h_p), lambda i: (0, 0)),
                pl.BlockSpec((h_p, out_p), lambda i: (0, 0)),
                pl.BlockSpec((1, out_p), lambda i: (0, 0)),
            ],
            out_specs=pl.BlockSpec((tm_eff, out_p), lambda i: (i, 0)),
        ),
        compiler_params=pltpu.CompilerParams(
            dimension_semantics=("parallel",),  # row tiles split across TCs (v7x)
        ),
    )(x_p, w1_p, b1_p, w2_p, b2_p)

    return q_pad[:B, :n_out]


def dqn_act(obs, padded_params, n_out):
    """PyTorch `act` equivalent: greedy action for a single observation."""
    # TODO(synk): argmax could be fused into the kernel (mask padded lanes to
    # -inf, emit int32 action) to drop the second dispatch in a per-step loop.
    q = dqn_forward(obs.reshape(1, -1), padded_params, n_out=n_out)
    return int(jnp.argmax(q[0]))


def init_dqn_params(key, n_input, n_output, hidden=HIDDEN):
    """Deterministic PyTorch-style (kaiming-uniform-ish) init for the two Linears."""
    k1, k2, k3, k4 = jax.random.split(key, 4)
    bound1 = 1.0 / jnp.sqrt(n_input)
    bound2 = 1.0 / jnp.sqrt(hidden)
    w1 = jax.random.uniform(k1, (n_input, hidden), jnp.float32, -bound1, bound1)
    b1 = jax.random.uniform(k2, (1, hidden), jnp.float32, -bound1, bound1)
    w2 = jax.random.uniform(k3, (hidden, n_output), jnp.float32, -bound2, bound2)
    b2 = jax.random.uniform(k4, (1, n_output), jnp.float32, -bound2, bound2)
    return w1, b1, w2, b2


if __name__ == "__main__":
    key = jax.random.PRNGKey(0)
    kx, kp, kb = jax.random.split(key, 3)

    # CartPole-like DQN: obs dim 4, 2 actions.
    n_input, n_output = 4, 2
    w1, b1, w2, b2 = init_dqn_params(kp, n_input, n_output)
    padded = pad_dqn_params(w1, b1, w2, b2)

    # 1) Tiny act()-style batch (B=2): grid of one 8-row tile.
    B = 2
    x = jax.random.normal(kx, (B, n_input), dtype=jnp.float32)
    q = dqn_forward(x, padded, n_out=n_output)
    jax.block_until_ready(q)
    q_ref = jnp.tanh(x @ w1 + b1) @ w2 + b2
    assert q.shape == (B, n_output)
    assert jnp.allclose(q, q_ref, atol=1e-5, rtol=1e-5)

    # 2) Replay-style batch (B=512): exercises the row grid (2 tiles of 256),
    #    weights VMEM-resident across tiles, activation DMA pipelined.
    Bb = 512
    xb = jax.random.normal(kb, (Bb, n_input), dtype=jnp.float32)
    qb = dqn_forward(xb, padded, n_out=n_output)
    jax.block_until_ready(qb)
    qb_ref = jnp.tanh(xb @ w1 + b1) @ w2 + b2
    assert qb.shape == (Bb, n_output)
    assert jnp.allclose(qb, qb_ref, atol=1e-5, rtol=1e-5)

    # `act` equivalent (argmax over q-values for one observation).
    _ = dqn_act(x[0], padded, n_output)

    print("KERNEL_OK")
</pallas_src>

<mosaic_0001>
module attributes {stable_mosaic.version = 11 : i64} {
  func.func @dqn_mlp_kernel(%arg0: i32, %arg1: memref<8x128xf32, #tpu.memory_space<vmem>>, %arg2: memref<128x128xf32, #tpu.memory_space<vmem>>, %arg3: memref<1x128xf32, #tpu.memory_space<vmem>>, %arg4: memref<128x128xf32, #tpu.memory_space<vmem>>, %arg5: memref<1x128xf32, #tpu.memory_space<vmem>>, %arg6: memref<8x128xf32, #tpu.memory_space<vmem>>) attributes {dimension_semantics = [#tpu.dimension_semantics<parallel>], iteration_bounds = array<i64: 1>, scalar_prefetch = 0 : i64, scratch_operands = 0 : i64, tpu.core_type = #tpu.core_type<tc>, window_params = [{transform_indices = @transform_0, window_bounds = array<i64: 8, 128>}, {pipeline_mode = #tpu.pipeline_mode<synchronous>, transform_indices = @transform_1, window_bounds = array<i64: 128, 128>}, {pipeline_mode = #tpu.pipeline_mode<synchronous>, transform_indices = @transform_2, window_bounds = array<i64: 1, 128>}, {pipeline_mode = #tpu.pipeline_mode<synchronous>, transform_indices = @transform_3, window_bounds = array<i64: 128, 128>}, {pipeline_mode = #tpu.pipeline_mode<synchronous>, transform_indices = @transform_4, window_bounds = array<i64: 1, 128>}, {transform_indices = @transform_5, window_bounds = array<i64: 8, 128>}]} {
    %c0 = arith.constant 0 : index
    %c0_0 = arith.constant 0 : index
    %0 = vector.load %arg1[%c0, %c0_0] : memref<8x128xf32, #tpu.memory_space<vmem>>, vector<8x128xf32>
    %c0_1 = arith.constant 0 : index
    %c0_2 = arith.constant 0 : index
    %1 = vector.load %arg2[%c0_1, %c0_2] : memref<128x128xf32, #tpu.memory_space<vmem>>, vector<128x128xf32>
    %cst = arith.constant dense<0.000000e+00> : vector<8x128xf32>
    %2 = tpu.matmul %0, %1, %cst {dimension_numbers = #tpu.dot_dimension_numbers<[1], [0], [0], [1], [0, 0, 1, 1], [], []>} : vector<8x128xf32>, vector<128x128xf32>, vector<8x128xf32> -> vector<8x128xf32>
    %c0_3 = arith.constant 0 : index
    %c0_4 = arith.constant 0 : index
    %3 = vector.load %arg3[%c0_3, %c0_4] : memref<1x128xf32, #tpu.memory_space<vmem>>, vector<1x128xf32>
    %4 = vector.broadcast %3 : vector<1x128xf32> to vector<8x128xf32>
    %5 = arith.addf %2, %4 : vector<8x128xf32>
    %6 = math.tanh %5 : vector<8x128xf32>
    %c0_5 = arith.constant 0 : index
    %c0_6 = arith.constant 0 : index
    %7 = vector.load %arg4[%c0_5, %c0_6] : memref<128x128xf32, #tpu.memory_space<vmem>>, vector<128x128xf32>
    %cst_7 = arith.constant dense<0.000000e+00> : vector<8x128xf32>
    %8 = tpu.matmul %6, %7, %cst_7 {dimension_numbers = #tpu.dot_dimension_numbers<[1], [0], [0], [1], [0, 0, 1, 1], [], []>} : vector<8x128xf32>, vector<128x128xf32>, vector<8x128xf32> -> vector<8x128xf32>
    %c0_8 = arith.constant 0 : index
    %c0_9 = arith.constant 0 : index
    %9 = vector.load %arg5[%c0_8, %c0_9] : memref<1x128xf32, #tpu.memory_space<vmem>>, vector<1x128xf32>
    %10 = vector.broadcast %9 : vector<1x128xf32> to vector<8x128xf32>
    %11 = arith.addf %8, %10 : vector<8x128xf32>
    %c0_10 = arith.constant 0 : index
    %c0_11 = arith.constant 0 : index
    %12 = vector.load %arg6[%c0_10, %c0_11] : memref<8x128xf32, #tpu.memory_space<vmem>>, vector<8x128xf32>
    tpu.vector_store %arg6[%c0_10, %c0_11], %11 {strides = array<i32>} : memref<8x128xf32, #tpu.memory_space<vmem>>, vector<8x128xf32>,
    return
  }
  func.func @transform_0(%arg0: i32) -> (i32, i32) {
    %c0_i32 = arith.constant 0 : i32
    %c0_i32_0 = arith.constant 0 : i32
    return %arg0, %c0_i32 : i32, i32
  }
  func.func @transform_1(%arg0: i32) -> (i32, i32) {
    %c0_i32 = arith.constant 0 : i32
    %c0_i32_0 = arith.constant 0 : i32
    %c0_i32_1 = arith.constant 0 : i32
    return %c0_i32, %c0_i32_0 : i32, i32
  }
  func.func @transform_2(%arg0: i32) -> (i32, i32) {
    %c0_i32 = arith.constant 0 : i32
    %c0_i32_0 = arith.constant 0 : i32
    %c0_i32_1 = arith.constant 0 : i32
    return %c0_i32, %c0_i32_0 : i32, i32
  }
  func.func @transform_3(%arg0: i32) -> (i32, i32) {
    %c0_i32 = arith.constant 0 : i32
    %c0_i32_0 = arith.constant 0 : i32
    %c0_i32_1 = arith.constant 0 : i32
    return %c0_i32, %c0_i32_0 : i32, i32
  }
  func.func @transform_4(%arg0: i32) -> (i32, i32) {
    %c0_i32 = arith.constant 0 : i32
    %c0_i32_0 = arith.constant 0 : i32
    %c0_i32_1 = arith.constant 0 : i32
    return %c0_i32, %c0_i32_0 : i32, i32
  }
  func.func @transform_5(%arg0: i32) -> (i32, i32) {
    %c0_i32 = arith.constant 0 : i32
    %c0_i32_0 = arith.constant 0 : i32
    return %arg0, %c0_i32 : i32, i32
  }
}

</mosaic_0001>

<llo_original>
// kernel: dqn_forward.1
$region0: #{dqn_forward.1}
  #allocation0 [shape = 'u32[]', space=smem, size = 0x4, offset = 0x4, fixed_abs, tag = 'smem constant byte address 0x4 - core index']
  #allocation1 [shape = 'u32[72,128]{1,0:T(1,128)}', space=vmem, size = 0x9000, scoped, tag = 'internal scratch']
  %s0 = inlined_call_operand.vmem [shape: f32[8,128], index: 0, kind: input, shape index: {}]
  %s1 = inlined_call_operand.hbm [shape: f32[128,128], index: 1, kind: input, shape index: {}]
  %s2 = inlined_call_operand.vmem [shape: f32[1,128], index: 2, kind: input, shape index: {}]
  %s3 = inlined_call_operand.hbm [shape: f32[128,128], index: 3, kind: input, shape index: {}]
  %s4 = inlined_call_operand.vmem [shape: f32[1,128], index: 4, kind: input, shape index: {}]
  %s5 = inlined_call_operand.vmem [shape: f32[8,128], index: 5, kind: output, shape index: {}]
  %s6 = sld [smem:[#allocation0]]
  $region38: #{dqn_forward.1} parent=0
    _
  %s8 = ssub.s32 1, %s6
  %s9 = scalar_select 0, %s8, %s6
  $region1: #{dqn_forward.1} parent=0
    #allocation2 [shape = 'u8[65536]{0}', space=vmem, size = 0x10000, scoped, tag = 'input window, operand 1, single buffered']
    #allocation3 [shape = 's32[1]{0}', space=sflag, size = 0x4, scoped, tag = 'scoped memory for dqn_forward.1']
    #allocation4 [shape = 'u8[65536]{0}', space=vmem, size = 0x10000, scoped, tag = 'input window, operand 3, single buffered']
    #allocation5 [shape = 's32[1]{0}', space=sflag, size = 0x4, scoped, tag = 'scoped memory for dqn_forward.1']
    %10 = vsyncpa [#allocation3], 0
    %11 = vsyncpa [#allocation5], 0
    // Predicated region
    $region2: #{dqn_forward.1} parent=1 // pred_check
      _
    $region3: #{dqn_forward.1} parent=1 // pred_check_branch
      %13 = sbr.rel (0) target = $region5
    $region4: #{dqn_forward.1} parent=1 // pred_region
      _
    $region5: #{dqn_forward.1} parent=1 // pred_fallthru
      _
    // Predicated region
    $region6: #{dqn_forward.1} parent=1 // pred_check
      _
    $region7: #{dqn_forward.1} parent=1 // pred_check_branch
      %15 = sbr.rel (0) target = $region9
    $region8: #{dqn_forward.1} parent=1 // pred_region
      %17 = vsyncadd [#allocation3], 0
      %s18 = sshll.u32 %s1, 4
      %s19 = int_to_ptr.hbm [resolvable:$true] %s18
      %s20 = sshll.u32 [#allocation2], 4
      %s21 = int_to_ptr.vmem [resolvable:$true] %s20
      %26 = dma.hbm_to_vmem [thread:$0]  %s19, 2048, %s21, [#allocation3], 128, 128, 8
    $region9: #{dqn_forward.1} parent=1 // pred_fallthru
      _
    // Predicated region
    $region10: #{dqn_forward.1} parent=1 // pred_check
      _
    $region11: #{dqn_forward.1} parent=1 // pred_check_branch
      %28 = sbr.rel (0) target = $region13
    $region12: #{dqn_forward.1} parent=1 // pred_region
      _
    $region13: #{dqn_forward.1} parent=1 // pred_fallthru
      _
    // Predicated region
    $region14: #{dqn_forward.1} parent=1 // pred_check
      _
    $region15: #{dqn_forward.1} parent=1 // pred_check_branch
      %30 = sbr.rel (0) target = $region17
    $region16: #{dqn_forward.1} parent=1 // pred_region
      %32 = vsyncadd [#allocation5], 0
      %s33 = sshll.u32 %s3, 4
      %s34 = int_to_ptr.hbm [resolvable:$true] %s33
      %s35 = sshll.u32 [#allocation4], 4
      %s36 = int_to_ptr.vmem [resolvable:$true] %s35
      %41 = dma.hbm_to_vmem [thread:$0]  %s34, 2048, %s36, [#allocation5], 128, 128, 8
    $region17: #{dqn_forward.1} parent=1 // pred_fallthru
      _
    // Predicated region
    $region18: #{dqn_forward.1} parent=1 // pred_check
      _
    $region19: #{dqn_forward.1} parent=1 // pred_check_branch
      %43 = sbr.rel (0) target = $region21
    $region20: #{dqn_forward.1} parent=1 // pred_region
      _
    $region21: #{dqn_forward.1} parent=1 // pred_fallthru
      _
    // Predicated region
    $region22: #{dqn_forward.1} parent=1 // pred_check
      _
    $region23: #{dqn_forward.1} parent=1 // pred_check_branch
      %45 = sbr.rel (0) target = $region25
    $region24: #{dqn_forward.1} parent=1 // pred_region
      %47 = dma.done [#allocation3], 2048
    $region25: #{dqn_forward.1} parent=1 // pred_fallthru
      _
    // Predicated region
    $region26: #{dqn_forward.1} parent=1 // pred_check
      _
    $region27: #{dqn_forward.1} parent=1 // pred_check_branch
      %49 = sbr.rel (0) target = $region29
    $region28: #{dqn_forward.1} parent=1 // pred_region
      %51 = dma.done [#allocation5], 2048
    $region29: #{dqn_forward.1} parent=1 // pred_fallthru
      _
    %v52 = vld [vmem:[%s0] sm:$0xff]
    %v53 = vld [vmem:[#allocation2] sm:$0xff]
    %v54 = vld [vmem:[#allocation2 + $0x8] sm:$0xff]
    %v55 = vld [vmem:[#allocation2 + $0x10] sm:$0xff]
    %v56 = vld [vmem:[#allocation2 + $0x18] sm:$0xff]
    %v57 = vld [vmem:[#allocation2 + $0x20] sm:$0xff]
    %v58 = vld [vmem:[#allocation2 + $0x28] sm:$0xff]
    %v59 = vld [vmem:[#allocation2 + $0x30] sm:$0xff]
    %v60 = vld [vmem:[#allocation2 + $0x38] sm:$0xff]
    %v61 = vld [vmem:[#allocation2 + $0x40] sm:$0xff]
    %v62 = vld [vmem:[#allocation2 + $0x48] sm:$0xff]
    %v63 = vld [vmem:[#allocation2 + $0x50] sm:$0xff]
    %v64 = vld [vmem:[#allocation2 + $0x58] sm:$0xff]
    %v65 = vld [vmem:[#allocation2 + $0x60] sm:$0xff]
    %v66 = vld [vmem:[#allocation2 + $0x68] sm:$0xff]
    %v67 = vld [vmem:[#allocation2 + $0x70] sm:$0xff]
    %v68 = vld [vmem:[#allocation2 + $0x78] sm:$0xff]
    %v69 = vld [vmem:[%s2] sm:$0x1]
    %v71 = vperm.slane %v69, 0
    %73 = vmatpush.msra.mxu0 %v68
    %74 = vmatpush.msra.mxu0 %v67
    %75 = vmatpush.msra.mxu0 %v66
    %76 = vmatpush.msra.mxu0 %v65
    %77 = vmatpush.msra.mxu0 %v64
    %78 = vmatpush.msra.mxu0 %v63
    %79 = vmatpush.msra.mxu0 %v62
    %80 = vmatpush.msra.mxu0 %v61
    %81 = vmatpush.msra.mxu0 %v60
    %82 = vmatpush.msra.mxu0 %v59
    %83 = vmatpush.msra.mxu0 %v58
    %84 = vmatpush.msra.mxu0 %v57
    %85 = vmatpush.msra.mxu0 %v56
    %86 = vmatpush.msra.mxu0 %v55
    %87 = vmatpush.msra.mxu0 %v54
    %88 = vmatpush.msra.mxu0 %v53
    %89 = vmatmul.f32.gmra.mxu0 %v52
    %v90 = vpop.f32.mrf.mxu0
    %v91 = vadd.f32 %v71, %v90
    %92 = vdwg.mxu0
    %v93 = vtanh.pop %v91
    %v94 = vld [vmem:[#allocation4] sm:$0xff]
    %v95 = vld [vmem:[#allocation4 + $0x8] sm:$0xff]
    %v96 = vld [vmem:[#allocation4 + $0x10] sm:$0xff]
    %v97 = vld [vmem:[#allocation4 + $0x18] sm:$0xff]
    %v98 = vld [vmem:[#allocation4 + $0x20] sm:$0xff]
    %v99 = vld [vmem:[#allocation4 + $0x28] sm:$0xff]
    %v100 = vld [vmem:[#allocation4 + $0x30] sm:$0xff]
    %v101 = vld [vmem:[#allocation4 + $0x38] sm:$0xff]
    %v102 = vld [vmem:[#allocation4 + $0x40] sm:$0xff]
    %v103 = vld [vmem:[#allocation4 + $0x48] sm:$0xff]
    %v104 = vld [vmem:[#allocation4 + $0x50] sm:$0xff]
    %v105 = vld [vmem:[#allocation4 + $0x58] sm:$0xff]
    %v106 = vld [vmem:[#allocation4 + $0x60] sm:$0xff]
    %v107 = vld [vmem:[#allocation4 + $0x68] sm:$0xff]
    %v108 = vld [vmem:[#allocation4 + $0x70] sm:$0xff]
    %v109 = vld [vmem:[#allocation4 + $0x78] sm:$0xff]
    %v110 = vld [vmem:[%s4] sm:$0x1]
    %v112 = vperm.slane %v110, 0
    %114 = vmatpush.msra.mxu0 %v109
    %115 = vmatpush.msra.mxu0 %v108
    %116 = vmatpush.msra.mxu0 %v107
    %117 = vmatpush.msra.mxu0 %v106
    %118 = vmatpush.msra.mxu0 %v105
    %119 = vmatpush.msra.mxu0 %v104
    %120 = vmatpush.msra.mxu0 %v103
    %121 = vmatpush.msra.mxu0 %v102
    %122 = vmatpush.msra.mxu0 %v101
    %123 = vmatpush.msra.mxu0 %v100
    %124 = vmatpush.msra.mxu0 %v99
    %125 = vmatpush.msra.mxu0 %v98
    %126 = vmatpush.msra.mxu0 %v97
    %127 = vmatpush.msra.mxu0 %v96
    %128 = vmatpush.msra.mxu0 %v95
    %129 = vmatpush.msra.mxu0 %v94
    %130 = vmatmul.f32.gmra.mxu0 %v93
    %v131 = vpop.f32.mrf.mxu0
    %v132 = vadd.f32 %v112, %v131
    %133 = vdwg.mxu0
    %134 = vst [vmem:[%s5] sm:$0xff] %v132
    // Predicated region
    $region30: #{dqn_forward.1} parent=1 // pred_check
      _
    $region31: #{dqn_forward.1} parent=1 // pred_check_branch
      %136 = sbr.rel (0) target = $region33
    $region32: #{dqn_forward.1} parent=1 // pred_region
      _
    $region33: #{dqn_forward.1} parent=1 // pred_fallthru
      _
    // Predicated region
    $region34: #{dqn_forward.1} parent=1 // pred_check
      _
    $region35: #{dqn_forward.1} parent=1 // pred_check_branch
      %138 = sbr.rel (0) target = $region37
    $region36: #{dqn_forward.1} parent=1 // pred_region
      _
    $region37: #{dqn_forward.1} parent=1 // pred_fallthru
      _
    %139 = vsyncpa [#allocation3], 1
    %140 = vsyncpa [#allocation5], 1

</llo_original>
